<compile_context>
chip_gen: v7x
topology: tpu7x:2x2x1
jax: 0.10.0
libtpu: 0.0.40
codegen_flags: <defaults>
</compile_context>

<pallas_src>
import functools
import math

import jax
import jax.numpy as jnp
from jax import lax
from jax.experimental import pallas as pl
from jax.experimental.pallas import tpu as pltpu


def _round_up(a, b):
    return -(-a // b) * b


# ----------------------------------------------------------------------------
# In-kernel math helpers
# ----------------------------------------------------------------------------
def _erf(x):
    """Abramowitz & Stegun 7.1.26 rational approximation of erf (|err|<=1.5e-7)."""
    a1, a2, a3, a4, a5 = (0.254829592, -0.284496736, 1.421413741,
                          -1.453152027, 1.061405429)
    p = 0.3275911
    s = jnp.where(x < 0.0, -1.0, 1.0)
    ax = jnp.abs(x)
    t = 1.0 / (1.0 + p * ax)
    poly = t * (a1 + t * (a2 + t * (a3 + t * (a4 + t * a5))))
    return s * (1.0 - poly * jnp.exp(-ax * ax))


def _gelu_exact(x):
    # Matches PyTorch nn.GELU() default (erf-based), not the tanh approximation.
    return 0.5 * x * (1.0 + _erf(x * 0.7071067811865476))


# ----------------------------------------------------------------------------
# Fused Classifier kernel (transposed, lane-dense epilogue)
# ----------------------------------------------------------------------------
def _classifier_kernel(x_ref, w1t_ref, b1t_ref, w2t_ref, b2t_ref, o_ref):
    x = x_ref[...]                                                    # (TM, D)
    # cls^T = W1^T @ x^T as one MXU contraction over D (contract last dims of
    # both operands; no explicit transpose of x).  Result: (NC, TM), batch on
    # lanes, classes on sublanes.
    cls_t = lax.dot_general(
        w1t_ref[...], x,
        dimension_numbers=(((1,), (1,)), ((), ())),
        preferred_element_type=jnp.float32) + b1t_ref[...]           # (NC, TM)
    h = _gelu_exact(cls_t)
    y_t = jnp.dot(w2t_ref[...], h,
                  preferred_element_type=jnp.float32) + b2t_ref[...]  # (NC, TM)
    # nn.Dropout(p) is identity in eval/inference mode.
    z = y_t + cls_t
    # Softmax over the class axis (= sublanes here); each batch row is its own
    # lane, so padded/garbage-free rows never mix.
    z = z - jnp.max(z, axis=0, keepdims=True)
    e = jnp.exp(z)
    o_ref[...] = (e / jnp.sum(e, axis=0, keepdims=True)).astype(o_ref.dtype)


def classifier_forward(params, x, *, tile_m=4096):
    """x: (batch, embedding_dim) float32 -> (batch, num_class) probabilities."""
    w1, b1, w2, b2 = params["w1"], params["b1"], params["w2"], params["b2"]
    m, d = x.shape
    nc = w1.shape[1]
    assert d == w1.shape[0]
    assert d % 128 == 0, "embedding_dim must be a multiple of 128 (lane width)"

    # Kernel-side layouts: classes on sublanes, batch on lanes.
    w1t = w1.T                       # (nc, d)
    w2t = w2.T                       # (nc, nc)
    b1t = b1.reshape(nc, 1)
    b2t = b2.reshape(nc, 1)

    # --- batch tiling --------------------------------------------------------
    # Small batches: one tile (pad <= 7 rows). Larger batches: balanced tiles
    # that are multiples of 128 rows, >= 2 grid steps (feeds both v7x TCs),
    # <= tile_m rows each; power-of-two batches divide exactly (no pad copy).
    small = 1024
    m8 = _round_up(m, 8)
    if m8 <= small:
        tm = m8
        ngrid = 1
    else:
        ngrid = max(pl.cdiv(m8, tile_m), 2)
        tm = _round_up(pl.cdiv(m8, ngrid), 128)
        ngrid = pl.cdiv(m8, tm)
    m_pad = tm * ngrid
    if m_pad != m:
        # Only for ragged batches; balanced tm keeps the padded region small.
        # (Zero rows -> finite softmax rows; sliced off below.)
        x = jnp.pad(x, ((0, m_pad - m), (0, 0)))

    out_t = pl.pallas_call(
        _classifier_kernel,
        out_shape=jax.ShapeDtypeStruct((nc, m_pad), jnp.float32),
        grid=(ngrid,),
        in_specs=[
            pl.BlockSpec((tm, d), lambda i: (i, 0)),     # x tiles (pipelined)
            pl.BlockSpec((nc, d), lambda i: (0, 0)),     # W1^T (VMEM-resident)
            pl.BlockSpec((nc, 1), lambda i: (0, 0)),     # b1
            pl.BlockSpec((nc, nc), lambda i: (0, 0)),    # W2^T
            pl.BlockSpec((nc, 1), lambda i: (0, 0)),     # b2
        ],
        out_specs=pl.BlockSpec((nc, tm), lambda i: (0, i)),  # lane-dense store
        compiler_params=pltpu.CompilerParams(
            dimension_semantics=("parallel",),
            vmem_limit_bytes=32 * 1024 * 1024),
    )(x, w1t, b1t, w2t, b2t)

    # Back to (batch, num_class); the transpose is tiny (m x 8 f32).
    return out_t[:, :m].T


# ----------------------------------------------------------------------------
# Deterministic parameter init (same shapes/distribution as nn.Linear defaults)
# ----------------------------------------------------------------------------
def init_classifier_params(key, embedding_dim=256, num_class=8):
    k1, k2, k3, k4 = jax.random.split(key, 4)
    lim1 = 1.0 / math.sqrt(embedding_dim)
    lim2 = 1.0 / math.sqrt(num_class)
    # Weights stored (in, out) vs. torch's (out, in) so the math reads x @ W.
    return {
        "w1": jax.random.uniform(k1, (embedding_dim, num_class), jnp.float32,
                                 -lim1, lim1),
        "b1": jax.random.uniform(k2, (num_class,), jnp.float32, -lim1, lim1),
        "w2": jax.random.uniform(k3, (num_class, num_class), jnp.float32,
                                 -lim2, lim2),
        "b2": jax.random.uniform(k4, (num_class,), jnp.float32, -lim2, lim2),
    }


# ----------------------------------------------------------------------------
# Pure-JAX reference (for validation)
# ----------------------------------------------------------------------------
def classifier_reference(params, x):
    cls = x @ params["w1"] + params["b1"]
    h = jax.nn.gelu(cls, approximate=False)
    y = h @ params["w2"] + params["b2"]
    # Dropout: identity in eval mode.
    z = y + cls
    return jax.nn.softmax(z, axis=1)


if __name__ == "__main__":
    key = jax.random.PRNGKey(0)
    k_params, k_x1, k_x2 = jax.random.split(key, 3)

    embedding_dim, num_class = 256, 8
    params = init_classifier_params(k_params, embedding_dim, num_class)

    fwd = jax.jit(functools.partial(classifier_forward, params))
    ref_fn = jax.jit(functools.partial(classifier_reference, params))

    def check(x):
        probs = jax.block_until_ready(fwd(x))
        assert probs.shape == (x.shape[0], num_class), probs.shape
        assert probs.dtype == jnp.float32
        assert bool(jnp.all(jnp.isfinite(probs)))
        # Rows are softmax distributions.
        assert bool(jnp.allclose(jnp.sum(probs, axis=1), 1.0, atol=1e-5))
        # Matches the pure-JAX / PyTorch-equivalent reference.
        ref = ref_fn(x)
        assert bool(jnp.allclose(probs, ref, atol=1e-3, rtol=1e-3)), (
            float(jnp.max(jnp.abs(probs - ref))))

    # Small single-tile case (grid=1, <= 7 pad rows).
    check(jax.random.normal(k_x1, (2, embedding_dim), jnp.float32))
    # Multi-tile pipelined case (grid=2 parallel steps, no pad copy).
    check(jax.random.normal(k_x2, (1536, embedding_dim), jnp.float32))

    print("KERNEL_OK")
</pallas_src>

<mosaic_0001>
module attributes {stable_mosaic.version = 11 : i64} {
  func.func @_classifier_kernel(%arg0: i32, %arg1: memref<8x256xf32, #tpu.memory_space<vmem>>, %arg2: memref<8x256xf32, #tpu.memory_space<vmem>>, %arg3: memref<8x1xf32, #tpu.memory_space<vmem>>, %arg4: memref<8x8xf32, #tpu.memory_space<vmem>>, %arg5: memref<8x1xf32, #tpu.memory_space<vmem>>, %arg6: memref<8x8xf32, #tpu.memory_space<vmem>>) attributes {dimension_semantics = [#tpu.dimension_semantics<parallel>], iteration_bounds = array<i64: 1>, scalar_prefetch = 0 : i64, scratch_operands = 0 : i64, tpu.core_type = #tpu.core_type<tc>, window_params = [{transform_indices = @transform_0, window_bounds = array<i64: 8, 256>}, {pipeline_mode = #tpu.pipeline_mode<synchronous>, transform_indices = @transform_1, window_bounds = array<i64: 8, 256>}, {pipeline_mode = #tpu.pipeline_mode<synchronous>, transform_indices = @transform_2, window_bounds = array<i64: 8, 1>}, {pipeline_mode = #tpu.pipeline_mode<synchronous>, transform_indices = @transform_3, window_bounds = array<i64: 8, 8>}, {pipeline_mode = #tpu.pipeline_mode<synchronous>, transform_indices = @transform_4, window_bounds = array<i64: 8, 1>}, {transform_indices = @transform_5, window_bounds = array<i64: 8, 8>}]} {
    %c0 = arith.constant 0 : index
    %c0_0 = arith.constant 0 : index
    %0 = vector.load %arg1[%c0, %c0_0] : memref<8x256xf32, #tpu.memory_space<vmem>>, vector<8x256xf32>
    %c0_1 = arith.constant 0 : index
    %c0_2 = arith.constant 0 : index
    %1 = vector.load %arg2[%c0_1, %c0_2] : memref<8x256xf32, #tpu.memory_space<vmem>>, vector<8x256xf32>
    %cst = arith.constant dense<0.000000e+00> : vector<8x8xf32>
    %2 = tpu.matmul %1, %0, %cst {dimension_numbers = #tpu.dot_dimension_numbers<[1], [1], [0], [0], [0, 0, 1, 0], [], []>} : vector<8x256xf32>, vector<8x256xf32>, vector<8x8xf32> -> vector<8x8xf32>
    %c0_3 = arith.constant 0 : index
    %c0_4 = arith.constant 0 : index
    %3 = vector.load %arg3[%c0_3, %c0_4] : memref<8x1xf32, #tpu.memory_space<vmem>>, vector<8x1xf32>
    %4 = vector.broadcast %3 : vector<8x1xf32> to vector<8x8xf32>
    %5 = arith.addf %2, %4 : vector<8x8xf32>
    %cst_5 = arith.constant 5.000000e-01 : f32
    %6 = vector.broadcast %cst_5 : f32 to vector<8x8xf32>
    %7 = arith.mulf %6, %5 : vector<8x8xf32>
    %cst_6 = arith.constant 0.707106769 : f32
    %8 = vector.broadcast %cst_6 : f32 to vector<8x8xf32>
    %9 = arith.mulf %5, %8 : vector<8x8xf32>
    %cst_7 = arith.constant 0.000000e+00 : f32
    %10 = vector.broadcast %cst_7 : f32 to vector<8x8xf32>
    %11 = arith.cmpf olt, %9, %10 : vector<8x8xf32>
    %cst_8 = arith.constant -1.000000e+00 : f32
    %cst_9 = arith.constant 1.000000e+00 : f32
    %12 = vector.broadcast %cst_8 : f32 to vector<8x8xf32>
    %13 = vector.broadcast %cst_9 : f32 to vector<8x8xf32>
    %14 = arith.select %11, %12, %13 : vector<8x8xi1>, vector<8x8xf32>
    %15 = math.absf %9 : vector<8x8xf32>
    %cst_10 = arith.constant 0.327591091 : f32
    %16 = vector.broadcast %cst_10 : f32 to vector<8x8xf32>
    %17 = arith.mulf %16, %15 : vector<8x8xf32>
    %cst_11 = arith.constant 1.000000e+00 : f32
    %18 = vector.broadcast %cst_11 : f32 to vector<8x8xf32>
    %19 = arith.addf %18, %17 : vector<8x8xf32>
    %cst_12 = arith.constant 1.000000e+00 : f32
    %20 = vector.broadcast %cst_12 : f32 to vector<8x8xf32>
    %21 = arith.divf %20, %19 : vector<8x8xf32>
    %cst_13 = arith.constant 1.06140542 : f32
    %22 = vector.broadcast %cst_13 : f32 to vector<8x8xf32>
    %23 = arith.mulf %21, %22 : vector<8x8xf32>
    %cst_14 = arith.constant -1.45315206 : f32
    %24 = vector.broadcast %cst_14 : f32 to vector<8x8xf32>
    %25 = arith.addf %24, %23 : vector<8x8xf32>
    %26 = arith.mulf %21, %25 : vector<8x8xf32>
    %cst_15 = arith.constant 1.42141378 : f32
    %27 = vector.broadcast %cst_15 : f32 to vector<8x8xf32>
    %28 = arith.addf %27, %26 : vector<8x8xf32>
    %29 = arith.mulf %21, %28 : vector<8x8xf32>
    %cst_16 = arith.constant -0.284496725 : f32
    %30 = vector.broadcast %cst_16 : f32 to vector<8x8xf32>
    %31 = arith.addf %30, %29 : vector<8x8xf32>
    %32 = arith.mulf %21, %31 : vector<8x8xf32>
    %cst_17 = arith.constant 0.254829586 : f32
    %33 = vector.broadcast %cst_17 : f32 to vector<8x8xf32>
    %34 = arith.addf %33, %32 : vector<8x8xf32>
    %35 = arith.mulf %21, %34 : vector<8x8xf32>
    %cst_18 = arith.constant 0.000000e+00 : f32
    %36 = vector.broadcast %cst_18 : f32 to vector<8x8xf32>
    %37 = arith.subf %36, %15 : vector<8x8xf32>
    %38 = arith.mulf %37, %15 : vector<8x8xf32>
    %39 = math.exp %38 : vector<8x8xf32>
    %40 = arith.mulf %35, %39 : vector<8x8xf32>
    %cst_19 = arith.constant 1.000000e+00 : f32
    %41 = vector.broadcast %cst_19 : f32 to vector<8x8xf32>
    %42 = arith.subf %41, %40 : vector<8x8xf32>
    %43 = arith.mulf %14, %42 : vector<8x8xf32>
    %cst_20 = arith.constant 1.000000e+00 : f32
    %44 = vector.broadcast %cst_20 : f32 to vector<8x8xf32>
    %45 = arith.addf %44, %43 : vector<8x8xf32>
    %46 = arith.mulf %7, %45 : vector<8x8xf32>
    %c0_21 = arith.constant 0 : index
    %c0_22 = arith.constant 0 : index
    %47 = vector.load %arg4[%c0_21, %c0_22] : memref<8x8xf32, #tpu.memory_space<vmem>>, vector<8x8xf32>
    %cst_23 = arith.constant dense<0.000000e+00> : vector<8x8xf32>
    %48 = tpu.matmul %47, %46, %cst_23 {dimension_numbers = #tpu.dot_dimension_numbers<[1], [0], [0], [1], [0, 0, 1, 1], [], []>} : vector<8x8xf32>, vector<8x8xf32>, vector<8x8xf32> -> vector<8x8xf32>
    %c0_24 = arith.constant 0 : index
    %c0_25 = arith.constant 0 : index
    %49 = vector.load %arg5[%c0_24, %c0_25] : memref<8x1xf32, #tpu.memory_space<vmem>>, vector<8x1xf32>
    %50 = vector.broadcast %49 : vector<8x1xf32> to vector<8x8xf32>
    %51 = arith.addf %48, %50 : vector<8x8xf32>
    %52 = arith.addf %51, %5 : vector<8x8xf32>
    %cst_26 = arith.constant dense<0xFF800000> : vector<8xf32>
    %53 = vector.multi_reduction <maximumf>, %52, %cst_26 [0] : vector<8x8xf32> to vector<8xf32>
    %54 = vector.shape_cast %53 : vector<8xf32> to vector<1x8xf32>
    %55 = vector.broadcast %54 : vector<1x8xf32> to vector<8x8xf32>
    %56 = arith.subf %52, %55 : vector<8x8xf32>
    %57 = math.exp %56 : vector<8x8xf32>
    %cst_27 = arith.constant dense<0.000000e+00> : vector<8xf32>
    %58 = vector.multi_reduction <add>, %57, %cst_27 [0] : vector<8x8xf32> to vector<8xf32>
    %59 = vector.shape_cast %58 : vector<8xf32> to vector<1x8xf32>
    %60 = vector.broadcast %59 : vector<1x8xf32> to vector<8x8xf32>
    %61 = arith.divf %57, %60 : vector<8x8xf32>
    %c0_28 = arith.constant 0 : index
    %c0_29 = arith.constant 0 : index
    %62 = vector.load %arg6[%c0_28, %c0_29] : memref<8x8xf32, #tpu.memory_space<vmem>>, vector<8x8xf32>
    tpu.vector_store %arg6[%c0_28, %c0_29], %61 {strides = array<i32>} : memref<8x8xf32, #tpu.memory_space<vmem>>, vector<8x8xf32>,
    return
  }
  func.func @transform_0(%arg0: i32) -> (i32, i32) {
    %c0_i32 = arith.constant 0 : i32
    %c0_i32_0 = arith.constant 0 : i32
    return %arg0, %c0_i32 : i32, i32
  }
  func.func @transform_1(%arg0: i32) -> (i32, i32) {
    %c0_i32 = arith.constant 0 : i32
    %c0_i32_0 = arith.constant 0 : i32
    %c0_i32_1 = arith.constant 0 : i32
    return %c0_i32, %c0_i32_0 : i32, i32
  }
  func.func @transform_2(%arg0: i32) -> (i32, i32) {
    %c0_i32 = arith.constant 0 : i32
    %c0_i32_0 = arith.constant 0 : i32
    %c0_i32_1 = arith.constant 0 : i32
    return %c0_i32, %c0_i32_0 : i32, i32
  }
  func.func @transform_3(%arg0: i32) -> (i32, i32) {
    %c0_i32 = arith.constant 0 : i32
    %c0_i32_0 = arith.constant 0 : i32
    %c0_i32_1 = arith.constant 0 : i32
    return %c0_i32, %c0_i32_0 : i32, i32
  }
  func.func @transform_4(%arg0: i32) -> (i32, i32) {
    %c0_i32 = arith.constant 0 : i32
    %c0_i32_0 = arith.constant 0 : i32
    %c0_i32_1 = arith.constant 0 : i32
    return %c0_i32, %c0_i32_0 : i32, i32
  }
  func.func @transform_5(%arg0: i32) -> (i32, i32) {
    %c0_i32 = arith.constant 0 : i32
    %c0_i32_0 = arith.constant 0 : i32
    return %c0_i32, %arg0 : i32, i32
  }
}

</mosaic_0001>

<llo_original>
// kernel: classifier_forward.1
$region0: #{classifier_forward.1}
  #allocation0 [shape = 'u32[]', space=smem, size = 0x4, offset = 0x4, fixed_abs, tag = 'smem constant byte address 0x4 - core index']
  #allocation1 [shape = 'u32[144,128]{1,0:T(1,128)}', space=vmem, size = 0x12000, scoped, tag = 'internal scratch']
  %s0 = inlined_call_operand.vmem [shape: f32[8,256], index: 0, kind: input, shape index: {}]
  %s1 = inlined_call_operand.vmem [shape: f32[8,256], index: 1, kind: input, shape index: {}]
  %s2 = inlined_call_operand.vmem [shape: f32[8,1], index: 2, kind: input, shape index: {}]
  %s3 = inlined_call_operand.hbm [shape: f32[8,8], index: 3, kind: input, shape index: {}]
  %s4 = inlined_call_operand.vmem [shape: f32[8,1], index: 4, kind: input, shape index: {}]
  %s5 = inlined_call_operand.vmem [shape: f32[8,8], index: 5, kind: output, shape index: {}]
  %s6 = sld [smem:[#allocation0]]
  $region34: #{classifier_forward.1} parent=0
    _
  %s8 = ssub.s32 1, %s6
  %s9 = scalar_select 0, %s8, %s6
  $region1: #{classifier_forward.1} parent=0
    #allocation2 [shape = 'u8[4096]{0}', space=vmem, size = 0x1000, scoped, tag = 'input window, operand 3, single buffered']
    #allocation3 [shape = 's32[1]{0}', space=sflag, size = 0x4, scoped, tag = 'scoped memory for classifier_forward.1']
    %10 = vsyncpa [#allocation3], 0
    // Predicated region
    $region2: #{classifier_forward.1} parent=1 // pred_check
      _
    $region3: #{classifier_forward.1} parent=1 // pred_check_branch
      %12 = sbr.rel (0) target = $region5
    $region4: #{classifier_forward.1} parent=1 // pred_region
      _
    $region5: #{classifier_forward.1} parent=1 // pred_fallthru
      _
    // Predicated region
    $region6: #{classifier_forward.1} parent=1 // pred_check
      _
    $region7: #{classifier_forward.1} parent=1 // pred_check_branch
      %14 = sbr.rel (0) target = $region9
    $region8: #{classifier_forward.1} parent=1 // pred_region
      _
    $region9: #{classifier_forward.1} parent=1 // pred_fallthru
      _
    // Predicated region
    $region10: #{classifier_forward.1} parent=1 // pred_check
      _
    $region11: #{classifier_forward.1} parent=1 // pred_check_branch
      %16 = sbr.rel (0) target = $region13
    $region12: #{classifier_forward.1} parent=1 // pred_region
      _
    $region13: #{classifier_forward.1} parent=1 // pred_fallthru
      _
    // Predicated region
    $region14: #{classifier_forward.1} parent=1 // pred_check
      _
    $region15: #{classifier_forward.1} parent=1 // pred_check_branch
      %18 = sbr.rel (0) target = $region17
    $region16: #{classifier_forward.1} parent=1 // pred_region
      %s20 = ssub.s32 128, 128
      %21 = vsyncadd [#allocation3], %s20
      %s23 = sshll.u32 [#allocation2], 4
      %s24 = int_to_ptr.vmem [resolvable:$true] %s23
      %26 = dma.hbm_to_vmem [thread:$0]  %s3, 128, %s24, [#allocation3]
    $region17: #{classifier_forward.1} parent=1 // pred_fallthru
      _
    // Predicated region
    $region18: #{classifier_forward.1} parent=1 // pred_check
      _
    $region19: #{classifier_forward.1} parent=1 // pred_check_branch
      %28 = sbr.rel (0) target = $region21
    $region20: #{classifier_forward.1} parent=1 // pred_region
      _
    $region21: #{classifier_forward.1} parent=1 // pred_fallthru
      _
    // Predicated region
    $region22: #{classifier_forward.1} parent=1 // pred_check
      _
    $region23: #{classifier_forward.1} parent=1 // pred_check_branch
      %30 = sbr.rel (0) target = $region25
    $region24: #{classifier_forward.1} parent=1 // pred_region
      %31 = dma.done [#allocation3], 128
    $region25: #{classifier_forward.1} parent=1 // pred_fallthru
      _
    %v32 = vld [vmem:[%s0] sm:$0xff]
    %v33 = vld [vmem:[%s0 + $0x8] sm:$0xff]
    %v34 = vld [vmem:[%s1] sm:$0xff]
    %v35 = vld [vmem:[%s1 + $0x8] sm:$0xff]
    %v36 = vld [vmem:[%s2] sm:$0xff]
    %38 = vset.pattern.permute.xlu0 0
    %39 = vperm.xlu0 %38, %v36
    %v40 = vpop.permute.xlu0 %39
    %42 = vmatprep.subr.mxu0 %v33
    %43 = vmatpush1.xpose.msra.mxu0 %v32
    %44 = vmatprep.subr.mxu0 0.0
    %45 = vmatpush1.xpose.msra.mxu0 0.0
    %46 = vmatprep.subr.mxu0 0.0
    %47 = vmatpush1.xpose.msra.mxu0 0.0
    %48 = vmatprep.subr.mxu0 0.0
    %49 = vmatpush1.xpose.msra.mxu0 0.0
    %50 = vmatprep.subr.mxu0 0.0
    %51 = vmatpush1.xpose.msra.mxu0 0.0
    %52 = vmatprep.subr.mxu0 0.0
    %53 = vmatpush1.xpose.msra.mxu0 0.0
    %54 = vmatprep.subr.mxu0 0.0
    %55 = vmatpush1.xpose.msra.mxu0 0.0
    %56 = vmatprep.subr.mxu0 0.0
    %57 = vmatpush1.xpose.msra.mxu0 0.0
    %58 = vmatprep.subr.mxu0 0.0
    %59 = vmatpush1.xpose.msra.mxu0 0.0
    %60 = vmatprep.subr.mxu0 0.0
    %61 = vmatpush1.xpose.msra.mxu0 0.0
    %62 = vmatprep.subr.mxu0 0.0
    %63 = vmatpush1.xpose.msra.mxu0 0.0
    %64 = vmatprep.subr.mxu0 0.0
    %65 = vmatpush1.xpose.msra.mxu0 0.0
    %66 = vmatprep.subr.mxu0 0.0
    %67 = vmatpush1.xpose.msra.mxu0 0.0
    %68 = vmatprep.subr.mxu0 0.0
    %69 = vmatpush1.xpose.msra.mxu0 0.0
    %70 = vmatprep.subr.mxu0 0.0
    %71 = vmatpush1.xpose.msra.mxu0 0.0
    %72 = vmatprep.subr.mxu0 0.0
    %73 = vmatpush1.xpose.msra.mxu0 0.0
    %74 = vmatprep.subr.mxu0 0.0
    %75 = vmatpush1.xpose.msra.mxu0 0.0
    %76 = vmatprep.subr.mxu0 0.0
    %77 = vmatpush1.xpose.msra.mxu0 0.0
    %78 = vmatprep.subr.mxu0 0.0
    %79 = vmatpush1.xpose.msra.mxu0 0.0
    %80 = vmatprep.subr.mxu0 0.0
    %81 = vmatpush1.xpose.msra.mxu0 0.0
    %82 = vmatprep.subr.mxu0 0.0
    %83 = vmatpush1.xpose.msra.mxu0 0.0
    %84 = vmatprep.subr.mxu0 0.0
    %85 = vmatpush1.xpose.msra.mxu0 0.0
    %86 = vmatprep.subr.mxu0 0.0
    %87 = vmatpush1.xpose.msra.mxu0 0.0
    %88 = vmatprep.subr.mxu0 0.0
    %89 = vmatpush1.xpose.msra.mxu0 0.0
    %90 = vmatprep.subr.mxu0 0.0
    %91 = vmatpush1.xpose.msra.mxu0 0.0
    %92 = vmatprep.subr.mxu0 0.0
    %93 = vmatpush1.xpose.msra.mxu0 0.0
    %94 = vmatprep.subr.mxu0 0.0
    %95 = vmatpush1.xpose.msra.mxu0 0.0
    %96 = vmatprep.subr.mxu0 0.0
    %97 = vmatpush1.xpose.msra.mxu0 0.0
    %98 = vmatprep.subr.mxu0 0.0
    %99 = vmatpush1.xpose.msra.mxu0 0.0
    %100 = vmatprep.subr.mxu0 0.0
    %101 = vmatpush1.xpose.msra.mxu0 0.0
    %102 = vmatprep.subr.mxu0 0.0
    %103 = vmatpush1.xpose.msra.mxu0 0.0
    %104 = vmatprep.subr.mxu0 0.0
    %105 = vmatpush1.xpose.msra.mxu0 0.0
    %106 = vmatprep.mubr.f32.mxu0 %v35
    %107 = vmatmul.mubr.f32.gmra.mrb[0].mxu0 %v34
    %v108 = vpop.f32.mrb[0].mxu0
    %v109 = vadd.f32 %v40, %v108
    %v110 = vpop.f32.mrb[0].mxu0
    %111 = vdwg.mxu0
    %v112 = vmul.f32 %v109, 0.5
    %v113 = vmul.f32 %v109, 0.70710677
    %vm114 = vcmp.lt.f32.partialorder %v113, 0.0
    %v115 = vsel %vm114, -1.0, 1.0
    %v116 = vand.u32 2147483647, %v113
    %v117 = vmul.f32 %v116, 0.3275911
    %v118 = vadd.f32 %v117, 1.0
    %v119 = vrcp.pop %v118
    %v120 = vmul.f32 1.0, %v119
    %v121 = vmul.f32 %v120, 1.0614054
    %v122 = vadd.f32 %v121, -1.4531521
    %v123 = vmul.f32 %v120, %v122
    %v124 = vadd.f32 %v123, 1.4214138
    %v125 = vmul.f32 %v120, %v124
    %v126 = vadd.f32 %v125, -0.28449672
    %v127 = vmul.f32 %v120, %v126
    %v128 = vadd.f32 %v127, 0.2548296
    %v129 = vmul.f32 %v120, %v128
    %v130 = vsub.f32 0.0, %v116
    %v131 = vmul.f32 %v130, %v116
    %v132 = vmul.f32 %v131, 1.442695
    %v133 = vpow.pop %v132
    %v134 = vmul.f32 %v129, %v133
    %v135 = vsub.f32 1.0, %v134
    %v136 = vmul.f32 %v115, %v135
    %v137 = vadd.f32 %v136, 1.0
    %v138 = vmul.f32 %v112, %v137
    %v139 = vld [vmem:[#allocation2] sm:$0xff]
    %v140 = vld [vmem:[%s4] sm:$0xff]
    %142 = vset.pattern.permute.xlu0 0
    %143 = vperm.xlu0 %142, %v140
    %v144 = vpop.permute.xlu0 %143
    %vm146 = vcmask 64512
    %v148 = vsel %vm146, %v139, 0
    %150 = vmatprep.subr.mxu0 0.0
    %151 = vmatpush1.msra.mxu0 %v138
    %152 = vmatprep.subr.mxu0 0.0
    %153 = vmatpush1.msra.mxu0 0.0
    %154 = vmatprep.subr.mxu0 0.0
    %155 = vmatpush1.msra.mxu0 0.0
    %156 = vmatprep.subr.mxu0 0.0
    %157 = vmatpush1.msra.mxu0 0.0
    %158 = vmatprep.subr.mxu0 0.0
    %159 = vmatpush1.msra.mxu0 0.0
    %160 = vmatprep.subr.mxu0 0.0
    %161 = vmatpush1.msra.mxu0 0.0
    %162 = vmatprep.subr.mxu0 0.0
    %163 = vmatpush1.msra.mxu0 0.0
    %164 = vmatprep.subr.mxu0 0.0
    %165 = vmatpush1.msra.mxu0 0.0
    %166 = vmatprep.subr.mxu0 0.0
    %167 = vmatpush1.msra.mxu0 0.0
    %168 = vmatprep.subr.mxu0 0.0
    %169 = vmatpush1.msra.mxu0 0.0
    %170 = vmatprep.subr.mxu0 0.0
    %171 = vmatpush1.msra.mxu0 0.0
    %172 = vmatprep.subr.mxu0 0.0
    %173 = vmatpush1.msra.mxu0 0.0
    %174 = vmatprep.subr.mxu0 0.0
    %175 = vmatpush1.msra.mxu0 0.0
    %176 = vmatprep.subr.mxu0 0.0
    %177 = vmatpush1.msra.mxu0 0.0
    %178 = vmatprep.subr.mxu0 0.0
    %179 = vmatpush1.msra.mxu0 0.0
    %180 = vmatprep.subr.mxu0 0.0
    %181 = vmatpush1.msra.mxu0 0.0
    %182 = vmatprep.subr.mxu0 0.0
    %183 = vmatpush1.msra.mxu0 0.0
    %184 = vmatprep.subr.mxu0 0.0
    %185 = vmatpush1.msra.mxu0 0.0
    %186 = vmatprep.subr.mxu0 0.0
    %187 = vmatpush1.msra.mxu0 0.0
    %188 = vmatprep.subr.mxu0 0.0
    %189 = vmatpush1.msra.mxu0 0.0
    %190 = vmatprep.subr.mxu0 0.0
    %191 = vmatpush1.msra.mxu0 0.0
    %192 = vmatprep.subr.mxu0 0.0
    %193 = vmatpush1.msra.mxu0 0.0
    %194 = vmatprep.subr.mxu0 0.0
    %195 = vmatpush1.msra.mxu0 0.0
    %196 = vmatprep.subr.mxu0 0.0
    %197 = vmatpush1.msra.mxu0 0.0
    %198 = vmatprep.subr.mxu0 0.0
    %199 = vmatpush1.msra.mxu0 0.0
    %200 = vmatprep.subr.mxu0 0.0
    %201 = vmatpush1.msra.mxu0 0.0
    %202 = vmatprep.subr.mxu0 0.0
    %203 = vmatpush1.msra.mxu0 0.0
    %204 = vmatprep.subr.mxu0 0.0
    %205 = vmatpush1.msra.mxu0 0.0
    %206 = vmatprep.subr.mxu0 0.0
    %207 = vmatpush1.msra.mxu0 0.0
    %208 = vmatprep.subr.mxu0 0.0
    %209 = vmatpush1.msra.mxu0 0.0
    %210 = vmatprep.subr.mxu0 0.0
    %211 = vmatpush1.msra.mxu0 0.0
    %212 = vmatprep.subr.mxu0 0.0
    %213 = vmatpush1.msra.mxu0 0.0
    %214 = vmatprep.mubr.f32.mxu0 0.0
    %215 = vmatmul.mubr.f32.gmra.mrb[0].mxu0 %v148
    %v216 = vpop.f32.mrb[0].mxu0
    %v217 = vadd.f32 %v144, %v216
    %v218 = vpop.f32.mrb[0].mxu0
    %219 = vdwg.mxu0
    %v220 = vadd.f32 %v217, %v109
    %v221 = vsel %vm146, %v220, -inf
    %v222 = vrot.slane %v221, 4
    %v223 = vmax.f32 %v221, %v222
    %v224 = vrot.slane %v223, 2
    %v225 = vmax.f32 %v223, %v224
    %v226 = vrot.slane %v225, 1
    %v227 = vmax.f32 %v225, %v226
    %v228 = vsub.f32 %v220, %v227
    %v229 = vmul.f32 %v228, 1.442695
    %v230 = vpow.pop %v229
    %v231 = vsel %vm146, %v230, 0.0
    %v232 = vrot.slane %v231, 4
    %v233 = vadd.f32 %v231, %v232
    %v234 = vrot.slane %v233, 2
    %v235 = vadd.f32 %v233, %v234
    %v236 = vrot.slane %v235, 1
    %v237 = vadd.f32 %v235, %v236
    %v238 = vrcp.pop %v237
    %v239 = vmul.f32 %v230, %v238
    %240 = vst.msk [vmem:[%s5] sm:$0xff] %vm146, %v239
    // Predicated region
    $region26: #{classifier_forward.1} parent=1 // pred_check
      _
    $region27: #{classifier_forward.1} parent=1 // pred_check_branch
      %242 = sbr.rel (0) target = $region29
    $region28: #{classifier_forward.1} parent=1 // pred_region
      _
    $region29: #{classifier_forward.1} parent=1 // pred_fallthru
      _
    // Predicated region
    $region30: #{classifier_forward.1} parent=1 // pred_check
      _
    $region31: #{classifier_forward.1} parent=1 // pred_check_branch
      %244 = sbr.rel (0) target = $region33
    $region32: #{classifier_forward.1} parent=1 // pred_region
      _
    $region33: #{classifier_forward.1} parent=1 // pred_fallthru
      _
    %245 = vsyncpa [#allocation3], 1

</llo_original>
